<compile_context>
chip_gen: v5e
topology: v5e:2x2
jax: 0.10.0
libtpu: 0.0.40
codegen_flags: <defaults>
</compile_context>

<pallas_src>
import itertools

import numpy as np
import jax
import jax.numpy as jnp
from jax.experimental import pallas as pl
from jax.experimental.pallas import tpu as pltpu

LOSS_ROW_TILE = 2048            # (rows, 128) hinge tile per grid step (256K triplets)
_MIB = 1 << 20
_VMEM_BUDGET = 48 * _MIB        # soft budget used to down-select stage-1 tile size
_VMEM_CEILING = 56 * _MIB       # stay under v7x 64 MiB physical with Mosaic headroom


def _round_up(x, m):
    return ((x + m - 1) // m) * m


def _all_triplets(labels_np):
    """Deterministic AllTripletSelector: every valid (anchor, positive, negative)."""
    labels = np.asarray(labels_np)
    triplets = []
    for lab in np.unique(labels):
        pos_idx = np.where(labels == lab)[0]
        neg_idx = np.where(labels != lab)[0]
        if len(pos_idx) < 2 or len(neg_idx) < 1:
            continue
        for a, p in itertools.combinations(pos_idx, 2):
            for n in neg_idx:
                triplets.append((a, p, n))
    return np.asarray(triplets, dtype=np.int32).reshape(-1, 3)


# ---------------------------------------------------------------------------
# Kernel A: pairwise squared distances via the MXU (row-tile x col-tile grid).
#   dist[i, j] = ||x_i||^2 + ||x_j||^2 - 2 * x_i . x_j
# ---------------------------------------------------------------------------
def _pdist_kernel(xr_ref, xt_ref, sqr_ref, sqc_ref, out_ref):
    # xr: [TR, Dp] row tile,  xt: [Dp, TC] column tile of the pre-transposed x.
    g = jax.lax.dot_general(
        xr_ref[...], xt_ref[...], (((1,), (0,)), ((), ())),
        preferred_element_type=jnp.float32,
        precision=jax.lax.Precision.HIGHEST,   # see precision note at top of file
    )                                           # [TR, TC]
    out_ref[...] = sqr_ref[...] + sqc_ref[...] - 2.0 * g


def _stage1_vmem_bytes(tile, d_pad):
    # double-buffered f32 inputs/outputs, skinny blocks padded to (8,128)
    return 4 * (2 * tile * d_pad      # x row tile
                + 2 * d_pad * tile    # x^T col tile
                + 2 * tile * 128      # row sq-norms (lane-padded)
                + 2 * 8 * tile        # col sq-norms (sublane-padded)
                + 2 * tile * tile)    # dist output tile


# ---------------------------------------------------------------------------
# Kernel B: sum of relu(diff + margin) over a lane-dense triplet stream.
# Padded tail masked by global flat index >= T (no sentinel values).
# ---------------------------------------------------------------------------
def _make_loss_kernel(margin, n_triplets, rows):
    margin = float(margin)             # Python scalars -> compile-time immediates,
    inv_t = 1.0 / float(n_triplets)    # NOT captured jnp constants.
    tile_elems = rows * 128

    def kernel(diff_ref, out_ref, acc_ref):
        i = pl.program_id(0)

        @pl.when(i == 0)
        def _():
            acc_ref[...] = jnp.zeros_like(acc_ref)

        flat = (i * tile_elems
                + jax.lax.broadcasted_iota(jnp.int32, (rows, 128), 0) * 128
                + jax.lax.broadcasted_iota(jnp.int32, (rows, 128), 1))
        hinge = jnp.maximum(diff_ref[...] + margin, 0.0)
        acc_ref[...] += jnp.where(flat < n_triplets, hinge, 0.0)

        @pl.when(i == pl.num_programs(0) - 1)
        def _():
            part = jnp.sum(acc_ref[...], axis=0, keepdims=True)          # [1, 128]
            out_ref[...] = jnp.sum(part, axis=1, keepdims=True) * inv_t  # [1, 1]

    return kernel


@jax.jit
def _fused_diff(dist, idx_ap, idx_an):
    """Single fused (d_ap - d_an) stream, already in (r_pad, 128) layout."""
    flat = dist.reshape(-1)
    return flat[idx_ap] - flat[idx_an]


def online_triplet_loss(embeddings, labels, margin):
    """Returns (mean_loss, num_triplets) like OnlineTripletLoss.forward."""
    N, D = embeddings.shape

    # TODO(synk): triplet enumeration (AllTripletSelector) is host-side /
    # data-dependent, exactly like the PyTorch selector; it stays in numpy.
    triplets = _all_triplets(np.asarray(labels))
    T = int(triplets.shape[0])
    assert T > 0, "no valid triplets for these labels"

    # ---- stage 1: [n_pad, n_pad] pairwise squared distances (tiled MXU) -----
    n_pad = _round_up(N, 128)                   # lane-dense / MXU-aligned always
    d_pad = _round_up(D, 128)
    tile = 256 if n_pad % 256 == 0 else 128
    if tile > 128 and _stage1_vmem_bytes(tile, d_pad) > _VMEM_BUDGET:
        tile = 128
    # TODO(synk): for very large D add a K grid axis over d_pad with a VMEM f32
    # accumulator instead of loading full-depth (tile, d_pad) operand blocks.
    vmem1 = _stage1_vmem_bytes(tile, d_pad)
    vmem1_limit = min(_VMEM_CEILING, max(32 * _MIB, vmem1 + 8 * _MIB))

    x = jnp.zeros((n_pad, d_pad), jnp.float32).at[:N, :D].set(
        embeddings.astype(jnp.float32))
    xt = x.T                                     # one-time transpose -> no in-kernel vxpose
    sq = jnp.sum(x * x, axis=1)
    sq_row = sq[:, None]                         # [n_pad, 1]
    sq_col = sq[None, :]                         # [1, n_pad]

    dist = pl.pallas_call(
        _pdist_kernel,
        out_shape=jax.ShapeDtypeStruct((n_pad, n_pad), jnp.float32),
        grid_spec=pltpu.PrefetchScalarGridSpec(
            num_scalar_prefetch=0,
            grid=(n_pad // tile, n_pad // tile),
            in_specs=[
                pl.BlockSpec((tile, d_pad), lambda i, j: (i, 0)),  # x row tile
                pl.BlockSpec((d_pad, tile), lambda i, j: (0, j)),  # x^T col tile
                pl.BlockSpec((tile, 1), lambda i, j: (i, 0)),      # row sq-norms
                pl.BlockSpec((1, tile), lambda i, j: (0, j)),      # col sq-norms
            ],
            out_specs=pl.BlockSpec((tile, tile), lambda i, j: (i, j)),
        ),
        compiler_params=pltpu.CompilerParams(
            dimension_semantics=("parallel", "parallel"),
            vmem_limit_bytes=vmem1_limit,
        ),
    )(x, xt, sq_row, sq_col)

    # ---- stage 2: fused (d_ap - d_an) gather straight into (r_pad, 128) -----
    # TODO(synk): bigger structural option for large N: group triplets by
    # (anchor, positive) and reduce relu(d_ap - dist[a, :] + margin) over
    # lane-dense rows (scalar-prefetched anchor index_map), removing the O(T)
    # element gather entirely.
    r_needed = -(-T // 128)                      # ceil(T / 128)
    rows = min(LOSS_ROW_TILE, _round_up(r_needed, 8))
    r_pad = _round_up(r_needed, rows)
    t_pad = r_pad * 128

    a_idx = triplets[:, 0].astype(np.int64)
    ap_flat = (a_idx * n_pad + triplets[:, 1]).astype(np.int32)
    an_flat = (a_idx * n_pad + triplets[:, 2]).astype(np.int32)
    idx_ap = np.zeros((t_pad,), np.int32)
    idx_an = np.zeros((t_pad,), np.int32)
    idx_ap[:T] = ap_flat
    idx_an[:T] = an_flat
    diff = _fused_diff(dist,
                       jnp.asarray(idx_ap.reshape(r_pad, 128)),
                       jnp.asarray(idx_an.reshape(r_pad, 128)))

    # ---- stage 3: masked hinge + mean on lane-dense (rows, 128) tiles --------
    # TODO(synk): on v7x (2 TCs) switch to per-block partial sums with a
    # "parallel" grid and sum the tiny partials in JAX.
    vmem3 = 4 * (2 * rows * 128 + rows * 128 + 2 * 8 * 128)
    out = pl.pallas_call(
        _make_loss_kernel(margin, T, rows),
        out_shape=jax.ShapeDtypeStruct((1, 1), jnp.float32),
        grid_spec=pltpu.PrefetchScalarGridSpec(
            num_scalar_prefetch=0,
            grid=(r_pad // rows,),
            in_specs=[pl.BlockSpec((rows, 128), lambda i: (i, 0))],
            out_specs=pl.BlockSpec((1, 1), lambda i: (0, 0)),
            scratch_shapes=[pltpu.VMEM((rows, 128), jnp.float32)],
        ),
        compiler_params=pltpu.CompilerParams(
            dimension_semantics=("arbitrary",),
            vmem_limit_bytes=min(_VMEM_CEILING, max(32 * _MIB, vmem3 + 8 * _MIB)),
        ),
    )(diff)

    return out[0, 0], T


if __name__ == "__main__":
    key = jax.random.PRNGKey(0)
    k_emb, k_lab = jax.random.split(key)

    N, D = 8, 32
    margin = 1.0
    embeddings = jax.random.normal(k_emb, (N, D), dtype=jnp.float32)
    labels = jax.random.randint(k_lab, (N,), 0, 2)

    loss, num_triplets = online_triplet_loss(embeddings, labels, margin)
    loss = jax.block_until_ready(loss)

    # pure-JAX reference of the PyTorch forward (diff-then-square)
    trip = jnp.asarray(_all_triplets(np.asarray(labels)))
    ap = jnp.sum((embeddings[trip[:, 0]] - embeddings[trip[:, 1]]) ** 2, axis=1)
    an = jnp.sum((embeddings[trip[:, 0]] - embeddings[trip[:, 2]]) ** 2, axis=1)
    ref = jnp.mean(jnp.maximum(ap - an + margin, 0.0))

    np.testing.assert_allclose(np.asarray(loss), np.asarray(ref), rtol=1e-4, atol=1e-4)
    assert num_triplets == trip.shape[0]
    print("KERNEL_OK")
</pallas_src>

<mosaic_0001>
module attributes {stable_mosaic.version = 11 : i64} {
  func.func @_pdist_kernel(%arg0: i32, %arg1: i32, %arg2: memref<128x128xf32, #tpu.memory_space<vmem>>, %arg3: memref<128x128xf32, #tpu.memory_space<vmem>>, %arg4: memref<128x1xf32, #tpu.memory_space<vmem>>, %arg5: memref<1x128xf32, #tpu.memory_space<vmem>>, %arg6: memref<128x128xf32, #tpu.memory_space<vmem>>) attributes {dimension_semantics = [#tpu.dimension_semantics<parallel>, #tpu.dimension_semantics<parallel>], iteration_bounds = array<i64: 1, 1>, scalar_prefetch = 0 : i64, scratch_operands = 0 : i64, tpu.core_type = #tpu.core_type<tc>, window_params = [{transform_indices = @transform_0, window_bounds = array<i64: 128, 128>}, {transform_indices = @transform_1, window_bounds = array<i64: 128, 128>}, {transform_indices = @transform_2, window_bounds = array<i64: 128, 1>}, {transform_indices = @transform_3, window_bounds = array<i64: 1, 128>}, {transform_indices = @transform_4, window_bounds = array<i64: 128, 128>}]} {
    %c0 = arith.constant 0 : index
    %c0_0 = arith.constant 0 : index
    %0 = vector.load %arg2[%c0, %c0_0] : memref<128x128xf32, #tpu.memory_space<vmem>>, vector<128x128xf32>
    %c0_1 = arith.constant 0 : index
    %c0_2 = arith.constant 0 : index
    %1 = vector.load %arg3[%c0_1, %c0_2] : memref<128x128xf32, #tpu.memory_space<vmem>>, vector<128x128xf32>
    %cst = arith.constant dense<0.000000e+00> : vector<128x128xf32>
    %2 = tpu.matmul %0, %1, %cst {dimension_numbers = #tpu.dot_dimension_numbers<[1], [0], [0], [1], [0, 0, 1, 1], [], []>, precision = #tpu.contract_precision<fp32>} : vector<128x128xf32>, vector<128x128xf32>, vector<128x128xf32> -> vector<128x128xf32>
    %c0_3 = arith.constant 0 : index
    %c0_4 = arith.constant 0 : index
    %3 = vector.load %arg4[%c0_3, %c0_4] : memref<128x1xf32, #tpu.memory_space<vmem>>, vector<128x1xf32>
    %c0_5 = arith.constant 0 : index
    %c0_6 = arith.constant 0 : index
    %4 = vector.load %arg5[%c0_5, %c0_6] : memref<1x128xf32, #tpu.memory_space<vmem>>, vector<1x128xf32>
    %5 = vector.broadcast %3 : vector<128x1xf32> to vector<128x128xf32>
    %6 = vector.broadcast %4 : vector<1x128xf32> to vector<128x128xf32>
    %7 = arith.addf %5, %6 : vector<128x128xf32>
    %cst_7 = arith.constant 2.000000e+00 : f32
    %8 = vector.broadcast %cst_7 : f32 to vector<128x128xf32>
    %9 = arith.mulf %8, %2 : vector<128x128xf32>
    %10 = arith.subf %7, %9 : vector<128x128xf32>
    %c0_8 = arith.constant 0 : index
    %c0_9 = arith.constant 0 : index
    %11 = vector.load %arg6[%c0_8, %c0_9] : memref<128x128xf32, #tpu.memory_space<vmem>>, vector<128x128xf32>
    tpu.vector_store %arg6[%c0_8, %c0_9], %10 {strides = array<i32>} : memref<128x128xf32, #tpu.memory_space<vmem>>, vector<128x128xf32>,
    return
  }
  func.func @transform_0(%arg0: i32, %arg1: i32) -> (i32, i32) {
    %c0_i32 = arith.constant 0 : i32
    %c0_i32_0 = arith.constant 0 : i32
    return %arg0, %c0_i32 : i32, i32
  }
  func.func @transform_1(%arg0: i32, %arg1: i32) -> (i32, i32) {
    %c0_i32 = arith.constant 0 : i32
    %c0_i32_0 = arith.constant 0 : i32
    return %c0_i32, %arg1 : i32, i32
  }
  func.func @transform_2(%arg0: i32, %arg1: i32) -> (i32, i32) {
    %c0_i32 = arith.constant 0 : i32
    %c0_i32_0 = arith.constant 0 : i32
    return %arg0, %c0_i32 : i32, i32
  }
  func.func @transform_3(%arg0: i32, %arg1: i32) -> (i32, i32) {
    %c0_i32 = arith.constant 0 : i32
    %c0_i32_0 = arith.constant 0 : i32
    return %c0_i32, %arg1 : i32, i32
  }
  func.func @transform_4(%arg0: i32, %arg1: i32) -> (i32, i32) {
    %c0_i32 = arith.constant 0 : i32
    return %arg0, %arg1 : i32, i32
  }
}

</mosaic_0001>

<llo_original>
// kernel: tpu_custom_call.1
$region0: #{tpu_custom_call.1}
  #allocation0 [shape = 'u32[]', space=smem, size = 0x4, offset = 0x4, fixed_abs, tag = 'smem constant byte address 0x4 - core index']
  #allocation1 [shape = 'u32[72,128]{1,0:T(1,128)}', space=vmem, size = 0x9000, scoped, tag = 'internal scratch']
  %s0 = inlined_call_operand.vmem [shape: f32[128,128], index: 0, kind: input, shape index: {}]
  %s1 = inlined_call_operand.hbm [shape: f32[128,128], index: 1, kind: input, shape index: {}]
  %s2 = inlined_call_operand.vmem [shape: f32[128,1], index: 2, kind: input, shape index: {}]
  %s3 = inlined_call_operand.vmem [shape: f32[1,128], index: 3, kind: input, shape index: {}]
  %s4 = inlined_call_operand.hbm [shape: f32[128,128], index: 4, kind: output, shape index: {}]
  %s5 = sld [smem:[#allocation0]]
  $region30: #{tpu_custom_call.1} parent=0
    _
  %s7 = ssub.s32 1, %s5
  %s8 = scalar_select 0, %s7, %s5
  $region1: #{tpu_custom_call.1} parent=0
    #allocation2 [shape = 'u8[65536]{0}', space=vmem, size = 0x10000, scoped, tag = 'input window, operand 1, single buffered']
    #allocation3 [shape = 's32[1]{0}', space=sflag, size = 0x4, scoped, tag = 'scoped memory for tpu_custom_call.1']
    #allocation4 [shape = 's32[1]{0}', space=sflag, size = 0x4, scoped, tag = 'scoped memory for tpu_custom_call.1']
    #allocation5 [shape = 'u8[65536]{0}', space=vmem, size = 0x10000, scoped, tag = 'output window, operand 0, single buffered']
    %9 = vsyncpa [#allocation3], 0
    %10 = vsyncpa [#allocation4], 0
    // Predicated region
    $region2: #{tpu_custom_call.1} parent=1 // pred_check
      _
    $region3: #{tpu_custom_call.1} parent=1 // pred_check_branch
      %12 = sbr.rel (0) target = $region5
    $region4: #{tpu_custom_call.1} parent=1 // pred_region
      _
    $region5: #{tpu_custom_call.1} parent=1 // pred_fallthru
      _
    // Predicated region
    $region6: #{tpu_custom_call.1} parent=1 // pred_check
      _
    $region7: #{tpu_custom_call.1} parent=1 // pred_check_branch
      %14 = sbr.rel (0) target = $region9
    $region8: #{tpu_custom_call.1} parent=1 // pred_region
      %16 = vsyncadd [#allocation3], 0
      %s17 = sshll.u32 %s1, 4
      %s18 = int_to_ptr.hbm [resolvable:$true] %s17
      %s19 = sshll.u32 [#allocation2], 4
      %s20 = int_to_ptr.vmem [resolvable:$true] %s19
      %25 = dma.hbm_to_vmem [thread:$0]  %s18, 2048, %s20, [#allocation3], 128, 128, 8
    $region9: #{tpu_custom_call.1} parent=1 // pred_fallthru
      _
    // Predicated region
    $region10: #{tpu_custom_call.1} parent=1 // pred_check
      _
    $region11: #{tpu_custom_call.1} parent=1 // pred_check_branch
      %27 = sbr.rel (0) target = $region13
    $region12: #{tpu_custom_call.1} parent=1 // pred_region
      _
    $region13: #{tpu_custom_call.1} parent=1 // pred_fallthru
      _
    // Predicated region
    $region14: #{tpu_custom_call.1} parent=1 // pred_check
      _
    $region15: #{tpu_custom_call.1} parent=1 // pred_check_branch
      %29 = sbr.rel (0) target = $region17
    $region16: #{tpu_custom_call.1} parent=1 // pred_region
      _
    $region17: #{tpu_custom_call.1} parent=1 // pred_fallthru
      _
    // Predicated region
    $region18: #{tpu_custom_call.1} parent=1 // pred_check
      _
    $region19: #{tpu_custom_call.1} parent=1 // pred_check_branch
      %31 = sbr.rel (0) target = $region21
    $region20: #{tpu_custom_call.1} parent=1 // pred_region
      %33 = dma.done [#allocation3], 2048
    $region21: #{tpu_custom_call.1} parent=1 // pred_fallthru
      _
    %v34 = vld [vmem:[%s0] sm:$0xff]
    %v35 = vld [vmem:[%s0 + $0x8] sm:$0xff]
    %v36 = vld [vmem:[%s0 + $0x10] sm:$0xff]
    %v37 = vld [vmem:[%s0 + $0x18] sm:$0xff]
    %v38 = vld [vmem:[%s0 + $0x20] sm:$0xff]
    %v39 = vld [vmem:[%s0 + $0x28] sm:$0xff]
    %v40 = vld [vmem:[%s0 + $0x30] sm:$0xff]
    %v41 = vld [vmem:[%s0 + $0x38] sm:$0xff]
    %v42 = vld [vmem:[%s0 + $0x40] sm:$0xff]
    %v43 = vld [vmem:[%s0 + $0x48] sm:$0xff]
    %v44 = vld [vmem:[%s0 + $0x50] sm:$0xff]
    %v45 = vld [vmem:[%s0 + $0x58] sm:$0xff]
    %v46 = vld [vmem:[%s0 + $0x60] sm:$0xff]
    %v47 = vld [vmem:[%s0 + $0x68] sm:$0xff]
    %v48 = vld [vmem:[%s0 + $0x70] sm:$0xff]
    %v49 = vld [vmem:[%s0 + $0x78] sm:$0xff]
    %v50 = vld [vmem:[#allocation2] sm:$0xff]
    %v51 = vld [vmem:[#allocation2 + $0x8] sm:$0xff]
    %v52 = vld [vmem:[#allocation2 + $0x10] sm:$0xff]
    %v53 = vld [vmem:[#allocation2 + $0x18] sm:$0xff]
    %v54 = vld [vmem:[#allocation2 + $0x20] sm:$0xff]
    %v55 = vld [vmem:[#allocation2 + $0x28] sm:$0xff]
    %v56 = vld [vmem:[#allocation2 + $0x30] sm:$0xff]
    %v57 = vld [vmem:[#allocation2 + $0x38] sm:$0xff]
    %v58 = vld [vmem:[#allocation2 + $0x40] sm:$0xff]
    %v59 = vld [vmem:[#allocation2 + $0x48] sm:$0xff]
    %v60 = vld [vmem:[#allocation2 + $0x50] sm:$0xff]
    %v61 = vld [vmem:[#allocation2 + $0x58] sm:$0xff]
    %v62 = vld [vmem:[#allocation2 + $0x60] sm:$0xff]
    %v63 = vld [vmem:[#allocation2 + $0x68] sm:$0xff]
    %v64 = vld [vmem:[#allocation2 + $0x70] sm:$0xff]
    %v65 = vld [vmem:[#allocation2 + $0x78] sm:$0xff]
    %v66 = vand.u32 %v65, 4294901760
    %67 = vmatpush.msra.mxu0 %v66
    %v68 = vand.u32 %v64, 4294901760
    %69 = vmatpush.msra.mxu0 %v68
    %v70 = vand.u32 %v63, 4294901760
    %71 = vmatpush.msra.mxu0 %v70
    %v72 = vand.u32 %v62, 4294901760
    %73 = vmatpush.msra.mxu0 %v72
    %v74 = vand.u32 %v61, 4294901760
    %75 = vmatpush.msra.mxu0 %v74
    %v76 = vand.u32 %v60, 4294901760
    %77 = vmatpush.msra.mxu0 %v76
    %v78 = vand.u32 %v59, 4294901760
    %79 = vmatpush.msra.mxu0 %v78
    %v80 = vand.u32 %v58, 4294901760
    %81 = vmatpush.msra.mxu0 %v80
    %v82 = vand.u32 %v57, 4294901760
    %83 = vmatpush.msra.mxu0 %v82
    %v84 = vand.u32 %v56, 4294901760
    %85 = vmatpush.msra.mxu0 %v84
    %v86 = vand.u32 %v55, 4294901760
    %87 = vmatpush.msra.mxu0 %v86
    %v88 = vand.u32 %v54, 4294901760
    %89 = vmatpush.msra.mxu0 %v88
    %v90 = vand.u32 %v53, 4294901760
    %91 = vmatpush.msra.mxu0 %v90
    %v92 = vand.u32 %v52, 4294901760
    %93 = vmatpush.msra.mxu0 %v92
    %v94 = vand.u32 %v51, 4294901760
    %95 = vmatpush.msra.mxu0 %v94
    %v96 = vand.u32 %v50, 4294901760
    %97 = vmatpush.msra.mxu0 %v96
    %v98 = vand.u32 %v34, 4294901760
    %v99 = vsub.f32 %v34, %v98
    %v100 = vand.u32 %v99, 4294901760
    %v101 = vsub.f32 %v99, %v100
    %v102 = vand.u32 %v101, 4294901760
    %103 = vmatmul.f32.gmra.mxu0 %v102
    %v104 = vpop.f32.mrf.mxu0
    %v105 = vadd.f32 0.0, %v104
    %v106 = vand.u32 %v35, 4294901760
    %v107 = vsub.f32 %v35, %v106
    %v108 = vand.u32 %v107, 4294901760
    %v109 = vsub.f32 %v107, %v108
    %v110 = vand.u32 %v109, 4294901760
    %111 = vmatmul.f32.gmra.mxu0 %v110
    %v112 = vpop.f32.mrf.mxu0
    %v113 = vadd.f32 0.0, %v112
    %v114 = vand.u32 %v36, 4294901760
    %v115 = vsub.f32 %v36, %v114
    %v116 = vand.u32 %v115, 4294901760
    %v117 = vsub.f32 %v115, %v116
    %v118 = vand.u32 %v117, 4294901760
    %119 = vmatmul.f32.gmra.mxu0 %v118
    %v120 = vpop.f32.mrf.mxu0
    %v121 = vadd.f32 0.0, %v120
    %v122 = vand.u32 %v37, 4294901760
    %v123 = vsub.f32 %v37, %v122
    %v124 = vand.u32 %v123, 4294901760
    %v125 = vsub.f32 %v123, %v124
    %v126 = vand.u32 %v125, 4294901760
    %127 = vmatmul.f32.gmra.mxu0 %v126
    %v128 = vpop.f32.mrf.mxu0
    %v129 = vadd.f32 0.0, %v128
    %v130 = vand.u32 %v38, 4294901760
    %v131 = vsub.f32 %v38, %v130
    %v132 = vand.u32 %v131, 4294901760
    %v133 = vsub.f32 %v131, %v132
    %v134 = vand.u32 %v133, 4294901760
    %135 = vmatmul.f32.gmra.mxu0 %v134
    %v136 = vpop.f32.mrf.mxu0
    %v137 = vadd.f32 0.0, %v136
    %v138 = vand.u32 %v39, 4294901760
    %v139 = vsub.f32 %v39, %v138
    %v140 = vand.u32 %v139, 4294901760
    %v141 = vsub.f32 %v139, %v140
    %v142 = vand.u32 %v141, 4294901760
    %143 = vmatmul.f32.gmra.mxu0 %v142
    %v144 = vpop.f32.mrf.mxu0
    %v145 = vadd.f32 0.0, %v144
    %v146 = vand.u32 %v40, 4294901760
    %v147 = vsub.f32 %v40, %v146
    %v148 = vand.u32 %v147, 4294901760
    %v149 = vsub.f32 %v147, %v148
    %v150 = vand.u32 %v149, 4294901760
    %151 = vmatmul.f32.gmra.mxu0 %v150
    %v152 = vpop.f32.mrf.mxu0
    %v153 = vadd.f32 0.0, %v152
    %v154 = vand.u32 %v41, 4294901760
    %v155 = vsub.f32 %v41, %v154
    %v156 = vand.u32 %v155, 4294901760
    %v157 = vsub.f32 %v155, %v156
    %v158 = vand.u32 %v157, 4294901760
    %159 = vmatmul.f32.gmra.mxu0 %v158
    %v160 = vpop.f32.mrf.mxu0
    %v161 = vadd.f32 0.0, %v160
    %v162 = vand.u32 %v42, 4294901760
    %v163 = vsub.f32 %v42, %v162
    %v164 = vand.u32 %v163, 4294901760
    %v165 = vsub.f32 %v163, %v164
    %v166 = vand.u32 %v165, 4294901760
    %167 = vmatmul.f32.gmra.mxu0 %v166
    %v168 = vpop.f32.mrf.mxu0
    %v169 = vadd.f32 0.0, %v168
    %v170 = vand.u32 %v43, 4294901760
    %v171 = vsub.f32 %v43, %v170
    %v172 = vand.u32 %v171, 4294901760
    %v173 = vsub.f32 %v171, %v172
    %v174 = vand.u32 %v173, 4294901760
    %175 = vmatmul.f32.gmra.mxu0 %v174
    %v176 = vpop.f32.mrf.mxu0
    %v177 = vadd.f32 0.0, %v176
    %v178 = vand.u32 %v44, 4294901760
    %v179 = vsub.f32 %v44, %v178
    %v180 = vand.u32 %v179, 4294901760
    %v181 = vsub.f32 %v179, %v180
    %v182 = vand.u32 %v181, 4294901760
    %183 = vmatmul.f32.gmra.mxu0 %v182
    %v184 = vpop.f32.mrf.mxu0
    %v185 = vadd.f32 0.0, %v184
    %v186 = vand.u32 %v45, 4294901760
    %v187 = vsub.f32 %v45, %v186
    %v188 = vand.u32 %v187, 4294901760
    %v189 = vsub.f32 %v187, %v188
    %v190 = vand.u32 %v189, 4294901760
    %191 = vmatmul.f32.gmra.mxu0 %v190
    %v192 = vpop.f32.mrf.mxu0
    %v193 = vadd.f32 0.0, %v192
    %v194 = vand.u32 %v46, 4294901760
    %v195 = vsub.f32 %v46, %v194
    %v196 = vand.u32 %v195, 4294901760
    %v197 = vsub.f32 %v195, %v196
    %v198 = vand.u32 %v197, 4294901760
    %199 = vmatmul.f32.gmra.mxu0 %v198
    %v200 = vpop.f32.mrf.mxu0
    %v201 = vadd.f32 0.0, %v200
    %v202 = vand.u32 %v47, 4294901760
    %v203 = vsub.f32 %v47, %v202
    %v204 = vand.u32 %v203, 4294901760
    %v205 = vsub.f32 %v203, %v204
    %v206 = vand.u32 %v205, 4294901760
    %207 = vmatmul.f32.gmra.mxu0 %v206
    %v208 = vpop.f32.mrf.mxu0
    %v209 = vadd.f32 0.0, %v208
    %v210 = vand.u32 %v48, 4294901760
    %v211 = vsub.f32 %v48, %v210
    %v212 = vand.u32 %v211, 4294901760
    %v213 = vsub.f32 %v211, %v212
    %v214 = vand.u32 %v213, 4294901760
    %215 = vmatmul.f32.gmra.mxu0 %v214
    %v216 = vpop.f32.mrf.mxu0
    %v217 = vadd.f32 0.0, %v216
    %v218 = vand.u32 %v49, 4294901760
    %v219 = vsub.f32 %v49, %v218
    %v220 = vand.u32 %v219, 4294901760
    %v221 = vsub.f32 %v219, %v220
    %v222 = vand.u32 %v221, 4294901760
    %223 = vmatmul.f32.gmra.mxu0 %v222
    %v224 = vpop.f32.mrf.mxu0
    %v225 = vadd.f32 0.0, %v224
    %226 = vdwg.mxu0
    %v227 = vand.u32 %v65, 4294901760
    %v228 = vsub.f32 %v65, %v227
    %v229 = vand.u32 %v228, 4294901760
    %v230 = vsub.f32 %v228, %v229
    %v231 = vand.u32 %v230, 4294901760
    %232 = vmatpush.msra.mxu0 %v231
    %v233 = vand.u32 %v64, 4294901760
    %v234 = vsub.f32 %v64, %v233
    %v235 = vand.u32 %v234, 4294901760
    %v236 = vsub.f32 %v234, %v235
    %v237 = vand.u32 %v236, 4294901760
    %238 = vmatpush.msra.mxu0 %v237
    %v239 = vand.u32 %v63, 4294901760
    %v240 = vsub.f32 %v63, %v239
    %v241 = vand.u32 %v240, 4294901760
    %v242 = vsub.f32 %v240, %v241
    %v243 = vand.u32 %v242, 4294901760
    %244 = vmatpush.msra.mxu0 %v243
    %v245 = vand.u32 %v62, 4294901760
    %v246 = vsub.f32 %v62, %v245
    %v247 = vand.u32 %v246, 4294901760
    %v248 = vsub.f32 %v246, %v247
    %v249 = vand.u32 %v248, 4294901760
    %250 = vmatpush.msra.mxu0 %v249
    %v251 = vand.u32 %v61, 4294901760
    %v252 = vsub.f32 %v61, %v251
    %v253 = vand.u32 %v252, 4294901760
    %v254 = vsub.f32 %v252, %v253
    %v255 = vand.u32 %v254, 4294901760
    %256 = vmatpush.msra.mxu0 %v255
    %v257 = vand.u32 %v60, 4294901760
    %v258 = vsub.f32 %v60, %v257
    %v259 = vand.u32 %v258, 4294901760
    %v260 = vsub.f32 %v258, %v259
    %v261 = vand.u32 %v260, 4294901760
    %262 = vmatpush.msra.mxu0 %v261
    %v263 = vand.u32 %v59, 4294901760
    %v264 = vsub.f32 %v59, %v263
    %v265 = vand.u32 %v264, 4294901760
    %v266 = vsub.f32 %v264, %v265
    %v267 = vand.u32 %v266, 4294901760
    %268 = vmatpush.msra.mxu0 %v267
    %v269 = vand.u32 %v58, 4294901760
    %v270 = vsub.f32 %v58, %v269
    %v271 = vand.u32 %v270, 4294901760
    %v272 = vsub.f32 %v270, %v271
    %v273 = vand.u32 %v272, 4294901760
    %274 = vmatpush.msra.mxu0 %v273
    %v275 = vand.u32 %v57, 4294901760
    %v276 = vsub.f32 %v57, %v275
    %v277 = vand.u32 %v276, 4294901760
    %v278 = vsub.f32 %v276, %v277
    %v279 = vand.u32 %v278, 4294901760
    %280 = vmatpush.msra.mxu0 %v279
    %v281 = vand.u32 %v56, 4294901760
    %v282 = vsub.f32 %v56, %v281
    %v283 = vand.u32 %v282, 4294901760
    %v284 = vsub.f32 %v282, %v283
    %v285 = vand.u32 %v284, 4294901760
    %286 = vmatpush.msra.mxu0 %v285
    %v287 = vand.u32 %v55, 4294901760
    %v288 = vsub.f32 %v55, %v287
    %v289 = vand.u32 %v288, 4294901760
    %v290 = vsub.f32 %v288, %v289
    %v291 = vand.u32 %v290, 4294901760
    %292 = vmatpush.msra.mxu0 %v291
    %v293 = vand.u32 %v54, 4294901760
    %v294 = vsub.f32 %v54, %v293
    %v295 = vand.u32 %v294, 4294901760
    %v296 = vsub.f32 %v294, %v295
    %v297 = vand.u32 %v296, 4294901760
    %298 = vmatpush.msra.mxu0 %v297
    %v299 = vand.u32 %v53, 4294901760
    %v300 = vsub.f32 %v53, %v299
    %v301 = vand.u32 %v300, 4294901760
    %v302 = vsub.f32 %v300, %v301
    %v303 = vand.u32 %v302, 4294901760
    %304 = vmatpush.msra.mxu0 %v303
    %v305 = vand.u32 %v52, 4294901760
    %v306 = vsub.f32 %v52, %v305
    %v307 = vand.u32 %v306, 4294901760
    %v308 = vsub.f32 %v306, %v307
    %v309 = vand.u32 %v308, 4294901760
    %310 = vmatpush.msra.mxu0 %v309
    %v311 = vand.u32 %v51, 4294901760
    %v312 = vsub.f32 %v51, %v311
    %v313 = vand.u32 %v312, 4294901760
    %v314 = vsub.f32 %v312, %v313
    %v315 = vand.u32 %v314, 4294901760
    %316 = vmatpush.msra.mxu0 %v315
    %v317 = vand.u32 %v50, 4294901760
    %v318 = vsub.f32 %v50, %v317
    %v319 = vand.u32 %v318, 4294901760
    %v320 = vsub.f32 %v318, %v319
    %v321 = vand.u32 %v320, 4294901760
    %322 = vmatpush.msra.mxu0 %v321
    %v323 = vand.u32 %v34, 4294901760
    %324 = vmatmul.f32.gmra.mxu0 %v323
    %v325 = vpop.f32.mrf.mxu0
    %v326 = vadd.f32 %v105, %v325
    %v327 = vand.u32 %v35, 4294901760
    %328 = vmatmul.f32.gmra.mxu0 %v327
    %v329 = vpop.f32.mrf.mxu0
    %v330 = vadd.f32 %v113, %v329
    %v331 = vand.u32 %v36, 4294901760
    %332 = vmatmul.f32.gmra.mxu0 %v331
    %v333 = vpop.f32.mrf.mxu0
    %v334 = vadd.f32 %v121, %v333
    %v335 = vand.u32 %v37, 4294901760
    %336 = vmatmul.f32.gmra.mxu0 %v335
    %v337 = vpop.f32.mrf.mxu0
    %v338 = vadd.f32 %v129, %v337
    %v339 = vand.u32 %v38, 4294901760
    %340 = vmatmul.f32.gmra.mxu0 %v339
    %v341 = vpop.f32.mrf.mxu0
    %v342 = vadd.f32 %v137, %v341
    %v343 = vand.u32 %v39, 4294901760
    %344 = vmatmul.f32.gmra.mxu0 %v343
    %v345 = vpop.f32.mrf.mxu0
    %v346 = vadd.f32 %v145, %v345
    %v347 = vand.u32 %v40, 4294901760
    %348 = vmatmul.f32.gmra.mxu0 %v347
    %v349 = vpop.f32.mrf.mxu0
    %v350 = vadd.f32 %v153, %v349
    %v351 = vand.u32 %v41, 4294901760
    %352 = vmatmul.f32.gmra.mxu0 %v351
    %v353 = vpop.f32.mrf.mxu0
    %v354 = vadd.f32 %v161, %v353
    %v355 = vand.u32 %v42, 4294901760
    %356 = vmatmul.f32.gmra.mxu0 %v355
    %v357 = vpop.f32.mrf.mxu0
    %v358 = vadd.f32 %v169, %v357
    %v359 = vand.u32 %v43, 4294901760
    %360 = vmatmul.f32.gmra.mxu0 %v359
    %v361 = vpop.f32.mrf.mxu0
    %v362 = vadd.f32 %v177, %v361
    %v363 = vand.u32 %v44, 4294901760
    %364 = vmatmul.f32.gmra.mxu0 %v363
    %v365 = vpop.f32.mrf.mxu0
    %v366 = vadd.f32 %v185, %v365
    %v367 = vand.u32 %v45, 4294901760
    %368 = vmatmul.f32.gmra.mxu0 %v367
    %v369 = vpop.f32.mrf.mxu0
    %v370 = vadd.f32 %v193, %v369
    %v371 = vand.u32 %v46, 4294901760
    %372 = vmatmul.f32.gmra.mxu0 %v371
    %v373 = vpop.f32.mrf.mxu0
    %v374 = vadd.f32 %v201, %v373
    %v375 = vand.u32 %v47, 4294901760
    %376 = vmatmul.f32.gmra.mxu0 %v375
    %v377 = vpop.f32.mrf.mxu0
    %v378 = vadd.f32 %v209, %v377
    %v379 = vand.u32 %v48, 4294901760
    %380 = vmatmul.f32.gmra.mxu0 %v379
    %v381 = vpop.f32.mrf.mxu0
    %v382 = vadd.f32 %v217, %v381
    %v383 = vand.u32 %v49, 4294901760
    %384 = vmatmul.f32.gmra.mxu0 %v383
    %v385 = vpop.f32.mrf.mxu0
    %v386 = vadd.f32 %v225, %v385
    %387 = vdwg.mxu0
    %v388 = vand.u32 %v65, 4294901760
    %v389 = vsub.f32 %v65, %v388
    %390 = vmatpush.msra.mxu0 %v389
    %v391 = vand.u32 %v64, 4294901760
    %v392 = vsub.f32 %v64, %v391
    %393 = vmatpush.msra.mxu0 %v392
    %v394 = vand.u32 %v63, 4294901760
    %v395 = vsub.f32 %v63, %v394
    %396 = vmatpush.msra.mxu0 %v395
    %v397 = vand.u32 %v62, 4294901760
    %v398 = vsub.f32 %v62, %v397
    %399 = vmatpush.msra.mxu0 %v398
    %v400 = vand.u32 %v61, 4294901760
    %v401 = vsub.f32 %v61, %v400
    %402 = vmatpush.msra.mxu0 %v401
    %v403 = vand.u32 %v60, 4294901760
    %v404 = vsub.f32 %v60, %v403
    %405 = vmatpush.msra.mxu0 %v404
    %v406 = vand.u32 %v59, 4294901760
    %v407 = vsub.f32 %v59, %v406
    %408 = vmatpush.msra.mxu0 %v407
    %v409 = vand.u32 %v58, 4294901760
    %v410 = vsub.f32 %v58, %v409
    %411 = vmatpush.msra.mxu0 %v410
    %v412 = vand.u32 %v57, 4294901760
    %v413 = vsub.f32 %v57, %v412
    %414 = vmatpush.msra.mxu0 %v413
    %v415 = vand.u32 %v56, 4294901760
    %v416 = vsub.f32 %v56, %v415
    %417 = vmatpush.msra.mxu0 %v416
    %v418 = vand.u32 %v55, 4294901760
    %v419 = vsub.f32 %v55, %v418
    %420 = vmatpush.msra.mxu0 %v419
    %v421 = vand.u32 %v54, 4294901760
    %v422 = vsub.f32 %v54, %v421
    %423 = vmatpush.msra.mxu0 %v422
    %v424 = vand.u32 %v53, 4294901760
    %v425 = vsub.f32 %v53, %v424
    %426 = vmatpush.msra.mxu0 %v425
    %v427 = vand.u32 %v52, 4294901760
    %v428 = vsub.f32 %v52, %v427
    %429 = vmatpush.msra.mxu0 %v428
    %v430 = vand.u32 %v51, 4294901760
    %v431 = vsub.f32 %v51, %v430
    %432 = vmatpush.msra.mxu0 %v431
    %v433 = vand.u32 %v50, 4294901760
    %v434 = vsub.f32 %v50, %v433
    %435 = vmatpush.msra.mxu0 %v434
    %v436 = vand.u32 %v34, 4294901760
    %v437 = vsub.f32 %v34, %v436
    %438 = vmatmul.f32.gmra.mxu0 %v437
    %v439 = vpop.f32.mrf.mxu0
    %v440 = vadd.f32 %v326, %v439
    %v441 = vand.u32 %v35, 4294901760
    %v442 = vsub.f32 %v35, %v441
    %443 = vmatmul.f32.gmra.mxu0 %v442
    %v444 = vpop.f32.mrf.mxu0
    %v445 = vadd.f32 %v330, %v444
    %v446 = vand.u32 %v36, 4294901760
    %v447 = vsub.f32 %v36, %v446
    %448 = vmatmul.f32.gmra.mxu0 %v447
    %v449 = vpop.f32.mrf.mxu0
    %v450 = vadd.f32 %v334, %v449
    %v451 = vand.u32 %v37, 4294901760
    %v452 = vsub.f32 %v37, %v451
    %453 = vmatmul.f32.gmra.mxu0 %v452
    %v454 = vpop.f32.mrf.mxu0
    %v455 = vadd.f32 %v338, %v454
    %v456 = vand.u32 %v38, 4294901760
    %v457 = vsub.f32 %v38, %v456
    %458 = vmatmul.f32.gmra.mxu0 %v457
    %v459 = vpop.f32.mrf.mxu0
    %v460 = vadd.f32 %v342, %v459
    %v461 = vand.u32 %v39, 4294901760
    %v462 = vsub.f32 %v39, %v461
    %463 = vmatmul.f32.gmra.mxu0 %v462
    %v464 = vpop.f32.mrf.mxu0
    %v465 = vadd.f32 %v346, %v464
    %v466 = vand.u32 %v40, 4294901760
    %v467 = vsub.f32 %v40, %v466
    %468 = vmatmul.f32.gmra.mxu0 %v467
    %v469 = vpop.f32.mrf.mxu0
    %v470 = vadd.f32 %v350, %v469
    %v471 = vand.u32 %v41, 4294901760
    %v472 = vsub.f32 %v41, %v471
    %473 = vmatmul.f32.gmra.mxu0 %v472
    %v474 = vpop.f32.mrf.mxu0
    %v475 = vadd.f32 %v354, %v474
    %v476 = vand.u32 %v42, 4294901760
    %v477 = vsub.f32 %v42, %v476
    %478 = vmatmul.f32.gmra.mxu0 %v477
    %v479 = vpop.f32.mrf.mxu0
    %v480 = vadd.f32 %v358, %v479
    %v481 = vand.u32 %v43, 4294901760
    %v482 = vsub.f32 %v43, %v481
    %483 = vmatmul.f32.gmra.mxu0 %v482
    %v484 = vpop.f32.mrf.mxu0
    %v485 = vadd.f32 %v362, %v484
    %v486 = vand.u32 %v44, 4294901760
    %v487 = vsub.f32 %v44, %v486
    %488 = vmatmul.f32.gmra.mxu0 %v487
    %v489 = vpop.f32.mrf.mxu0
    %v490 = vadd.f32 %v366, %v489
    %v491 = vand.u32 %v45, 4294901760
    %v492 = vsub.f32 %v45, %v491
    %493 = vmatmul.f32.gmra.mxu0 %v492
    %v494 = vpop.f32.mrf.mxu0
    %v495 = vadd.f32 %v370, %v494
    %v496 = vand.u32 %v46, 4294901760
    %v497 = vsub.f32 %v46, %v496
    %498 = vmatmul.f32.gmra.mxu0 %v497
    %v499 = vpop.f32.mrf.mxu0
    %v500 = vadd.f32 %v374, %v499
    %v501 = vand.u32 %v47, 4294901760
    %v502 = vsub.f32 %v47, %v501
    %503 = vmatmul.f32.gmra.mxu0 %v502
    %v504 = vpop.f32.mrf.mxu0
    %v505 = vadd.f32 %v378, %v504
    %v506 = vand.u32 %v48, 4294901760
    %v507 = vsub.f32 %v48, %v506
    %508 = vmatmul.f32.gmra.mxu0 %v507
    %v509 = vpop.f32.mrf.mxu0
    %v510 = vadd.f32 %v382, %v509
    %v511 = vand.u32 %v49, 4294901760
    %v512 = vsub.f32 %v49, %v511
    %513 = vmatmul.f32.gmra.mxu0 %v512
    %v514 = vpop.f32.mrf.mxu0
    %v515 = vadd.f32 %v386, %v514
    %516 = vdwg.mxu0
    %v517 = vand.u32 %v65, 4294901760
    %518 = vmatpush.msra.mxu0 %v517
    %v519 = vand.u32 %v64, 4294901760
    %520 = vmatpush.msra.mxu0 %v519
    %v521 = vand.u32 %v63, 4294901760
    %522 = vmatpush.msra.mxu0 %v521
    %v523 = vand.u32 %v62, 4294901760
    %524 = vmatpush.msra.mxu0 %v523
    %v525 = vand.u32 %v61, 4294901760
    %526 = vmatpush.msra.mxu0 %v525
    %v527 = vand.u32 %v60, 4294901760
    %528 = vmatpush.msra.mxu0 %v527
    %v529 = vand.u32 %v59, 4294901760
    %530 = vmatpush.msra.mxu0 %v529
    %v531 = vand.u32 %v58, 4294901760
    %532 = vmatpush.msra.mxu0 %v531
    %v533 = vand.u32 %v57, 4294901760
    %534 = vmatpush.msra.mxu0 %v533
    %v535 = vand.u32 %v56, 4294901760
    %536 = vmatpush.msra.mxu0 %v535
    %v537 = vand.u32 %v55, 4294901760
    %538 = vmatpush.msra.mxu0 %v537
    %v539 = vand.u32 %v54, 4294901760
    %540 = vmatpush.msra.mxu0 %v539
    %v541 = vand.u32 %v53, 4294901760
    %542 = vmatpush.msra.mxu0 %v541
    %v543 = vand.u32 %v52, 4294901760
    %544 = vmatpush.msra.mxu0 %v543
    %v545 = vand.u32 %v51, 4294901760
    %546 = vmatpush.msra.mxu0 %v545
    %v547 = vand.u32 %v50, 4294901760
    %548 = vmatpush.msra.mxu0 %v547
    %v549 = vand.u32 %v34, 4294901760
    %v550 = vsub.f32 %v34, %v549
    %v551 = vand.u32 %v550, 4294901760
    %552 = vmatmul.f32.gmra.mxu0 %v551
    %v553 = vpop.f32.mrf.mxu0
    %v554 = vadd.f32 %v440, %v553
    %v555 = vand.u32 %v35, 4294901760
    %v556 = vsub.f32 %v35, %v555
    %v557 = vand.u32 %v556, 4294901760
    %558 = vmatmul.f32.gmra.mxu0 %v557
    %v559 = vpop.f32.mrf.mxu0
    %v560 = vadd.f32 %v445, %v559
    %v561 = vand.u32 %v36, 4294901760
    %v562 = vsub.f32 %v36, %v561
    %v563 = vand.u32 %v562, 4294901760
    %564 = vmatmul.f32.gmra.mxu0 %v563
    %v565 = vpop.f32.mrf.mxu0
    %v566 = vadd.f32 %v450, %v565
    %v567 = vand.u32 %v37, 4294901760
    %v568 = vsub.f32 %v37, %v567
    %v569 = vand.u32 %v568, 4294901760
    %570 = vmatmul.f32.gmra.mxu0 %v569
    %v571 = vpop.f32.mrf.mxu0
    %v572 = vadd.f32 %v455, %v571
    %v573 = vand.u32 %v38, 4294901760
    %v574 = vsub.f32 %v38, %v573
    %v575 = vand.u32 %v574, 4294901760
    %576 = vmatmul.f32.gmra.mxu0 %v575
    %v577 = vpop.f32.mrf.mxu0
    %v578 = vadd.f32 %v460, %v577
    %v579 = vand.u32 %v39, 4294901760
    %v580 = vsub.f32 %v39, %v579
    %v581 = vand.u32 %v580, 4294901760
    %582 = vmatmul.f32.gmra.mxu0 %v581
    %v583 = vpop.f32.mrf.mxu0
    %v584 = vadd.f32 %v465, %v583
    %v585 = vand.u32 %v40, 4294901760
    %v586 = vsub.f32 %v40, %v585
    %v587 = vand.u32 %v586, 4294901760
    %588 = vmatmul.f32.gmra.mxu0 %v587
    %v589 = vpop.f32.mrf.mxu0
    %v590 = vadd.f32 %v470, %v589
    %v591 = vand.u32 %v41, 4294901760
    %v592 = vsub.f32 %v41, %v591
    %v593 = vand.u32 %v592, 4294901760
    %594 = vmatmul.f32.gmra.mxu0 %v593
    %v595 = vpop.f32.mrf.mxu0
    %v596 = vadd.f32 %v475, %v595
    %v597 = vand.u32 %v42, 4294901760
    %v598 = vsub.f32 %v42, %v597
    %v599 = vand.u32 %v598, 4294901760
    %600 = vmatmul.f32.gmra.mxu0 %v599
    %v601 = vpop.f32.mrf.mxu0
    %v602 = vadd.f32 %v480, %v601
    %v603 = vand.u32 %v43, 4294901760
    %v604 = vsub.f32 %v43, %v603
    %v605 = vand.u32 %v604, 4294901760
    %606 = vmatmul.f32.gmra.mxu0 %v605
    %v607 = vpop.f32.mrf.mxu0
    %v608 = vadd.f32 %v485, %v607
    %v609 = vand.u32 %v44, 4294901760
    %v610 = vsub.f32 %v44, %v609
    %v611 = vand.u32 %v610, 4294901760
    %612 = vmatmul.f32.gmra.mxu0 %v611
    %v613 = vpop.f32.mrf.mxu0
    %v614 = vadd.f32 %v490, %v613
    %v615 = vand.u32 %v45, 4294901760
    %v616 = vsub.f32 %v45, %v615
    %v617 = vand.u32 %v616, 4294901760
    %618 = vmatmul.f32.gmra.mxu0 %v617
    %v619 = vpop.f32.mrf.mxu0
    %v620 = vadd.f32 %v495, %v619
    %v621 = vand.u32 %v46, 4294901760
    %v622 = vsub.f32 %v46, %v621
    %v623 = vand.u32 %v622, 4294901760
    %624 = vmatmul.f32.gmra.mxu0 %v623
    %v625 = vpop.f32.mrf.mxu0
    %v626 = vadd.f32 %v500, %v625
    %v627 = vand.u32 %v47, 4294901760
    %v628 = vsub.f32 %v47, %v627
    %v629 = vand.u32 %v628, 4294901760
    %630 = vmatmul.f32.gmra.mxu0 %v629
    %v631 = vpop.f32.mrf.mxu0
    %v632 = vadd.f32 %v505, %v631
    %v633 = vand.u32 %v48, 4294901760
    %v634 = vsub.f32 %v48, %v633
    %v635 = vand.u32 %v634, 4294901760
    %636 = vmatmul.f32.gmra.mxu0 %v635
    %v637 = vpop.f32.mrf.mxu0
    %v638 = vadd.f32 %v510, %v637
    %v639 = vand.u32 %v49, 4294901760
    %v640 = vsub.f32 %v49, %v639
    %v641 = vand.u32 %v640, 4294901760
    %642 = vmatmul.f32.gmra.mxu0 %v641
    %v643 = vpop.f32.mrf.mxu0
    %v644 = vadd.f32 %v515, %v643
    %645 = vdwg.mxu0
    %v646 = vand.u32 %v65, 4294901760
    %v647 = vsub.f32 %v65, %v646
    %v648 = vand.u32 %v647, 4294901760
    %649 = vmatpush.msra.mxu0 %v648
    %v650 = vand.u32 %v64, 4294901760
    %v651 = vsub.f32 %v64, %v650
    %v652 = vand.u32 %v651, 4294901760
    %653 = vmatpush.msra.mxu0 %v652
    %v654 = vand.u32 %v63, 4294901760
    %v655 = vsub.f32 %v63, %v654
    %v656 = vand.u32 %v655, 4294901760
    %657 = vmatpush.msra.mxu0 %v656
    %v658 = vand.u32 %v62, 4294901760
    %v659 = vsub.f32 %v62, %v658
    %v660 = vand.u32 %v659, 4294901760
    %661 = vmatpush.msra.mxu0 %v660
    %v662 = vand.u32 %v61, 4294901760
    %v663 = vsub.f32 %v61, %v662
    %v664 = vand.u32 %v663, 4294901760
    %665 = vmatpush.msra.mxu0 %v664
    %v666 = vand.u32 %v60, 4294901760
    %v667 = vsub.f32 %v60, %v666
    %v668 = vand.u32 %v667, 4294901760
    %669 = vmatpush.msra.mxu0 %v668
    %v670 = vand.u32 %v59, 4294901760
    %v671 = vsub.f32 %v59, %v670
    %v672 = vand.u32 %v671, 4294901760
    %673 = vmatpush.msra.mxu0 %v672
    %v674 = vand.u32 %v58, 4294901760
    %v675 = vsub.f32 %v58, %v674
    %v676 = vand.u32 %v675, 4294901760
    %677 = vmatpush.msra.mxu0 %v676
    %v678 = vand.u32 %v57, 4294901760
    %v679 = vsub.f32 %v57, %v678
    %v680 = vand.u32 %v679, 4294901760
    %681 = vmatpush.msra.mxu0 %v680
    %v682 = vand.u32 %v56, 4294901760
    %v683 = vsub.f32 %v56, %v682
    %v684 = vand.u32 %v683, 4294901760
    %685 = vmatpush.msra.mxu0 %v684
    %v686 = vand.u32 %v55, 4294901760
    %v687 = vsub.f32 %v55, %v686
    %v688 = vand.u32 %v687, 4294901760
    %689 = vmatpush.msra.mxu0 %v688
    %v690 = vand.u32 %v54, 4294901760
    %v691 = vsub.f32 %v54, %v690
    %v692 = vand.u32 %v691, 4294901760
    %693 = vmatpush.msra.mxu0 %v692
    %v694 = vand.u32 %v53, 4294901760
    %v695 = vsub.f32 %v53, %v694
    %v696 = vand.u32 %v695, 4294901760
    %697 = vmatpush.msra.mxu0 %v696
    %v698 = vand.u32 %v52, 4294901760
    %v699 = vsub.f32 %v52, %v698
    %v700 = vand.u32 %v699, 4294901760
    %701 = vmatpush.msra.mxu0 %v700
    %v702 = vand.u32 %v51, 4294901760
    %v703 = vsub.f32 %v51, %v702
    %v704 = vand.u32 %v703, 4294901760
    %705 = vmatpush.msra.mxu0 %v704
    %v706 = vand.u32 %v50, 4294901760
    %v707 = vsub.f32 %v50, %v706
    %v708 = vand.u32 %v707, 4294901760
    %709 = vmatpush.msra.mxu0 %v708
    %v710 = vand.u32 %v34, 4294901760
    %711 = vmatmul.f32.gmra.mxu0 %v710
    %v712 = vpop.f32.mrf.mxu0
    %v713 = vadd.f32 %v554, %v712
    %v714 = vand.u32 %v35, 4294901760
    %715 = vmatmul.f32.gmra.mxu0 %v714
    %v716 = vpop.f32.mrf.mxu0
    %v717 = vadd.f32 %v560, %v716
    %v718 = vand.u32 %v36, 4294901760
    %719 = vmatmul.f32.gmra.mxu0 %v718
    %v720 = vpop.f32.mrf.mxu0
    %v721 = vadd.f32 %v566, %v720
    %v722 = vand.u32 %v37, 4294901760
    %723 = vmatmul.f32.gmra.mxu0 %v722
    %v724 = vpop.f32.mrf.mxu0
    %v725 = vadd.f32 %v572, %v724
    %v726 = vand.u32 %v38, 4294901760
    %727 = vmatmul.f32.gmra.mxu0 %v726
    %v728 = vpop.f32.mrf.mxu0
    %v729 = vadd.f32 %v578, %v728
    %v730 = vand.u32 %v39, 4294901760
    %731 = vmatmul.f32.gmra.mxu0 %v730
    %v732 = vpop.f32.mrf.mxu0
    %v733 = vadd.f32 %v584, %v732
    %v734 = vand.u32 %v40, 4294901760
    %735 = vmatmul.f32.gmra.mxu0 %v734
    %v736 = vpop.f32.mrf.mxu0
    %v737 = vadd.f32 %v590, %v736
    %v738 = vand.u32 %v41, 4294901760
    %739 = vmatmul.f32.gmra.mxu0 %v738
    %v740 = vpop.f32.mrf.mxu0
    %v741 = vadd.f32 %v596, %v740
    %v742 = vand.u32 %v42, 4294901760
    %743 = vmatmul.f32.gmra.mxu0 %v742
    %v744 = vpop.f32.mrf.mxu0
    %v745 = vadd.f32 %v602, %v744
    %v746 = vand.u32 %v43, 4294901760
    %747 = vmatmul.f32.gmra.mxu0 %v746
    %v748 = vpop.f32.mrf.mxu0
    %v749 = vadd.f32 %v608, %v748
    %v750 = vand.u32 %v44, 4294901760
    %751 = vmatmul.f32.gmra.mxu0 %v750
    %v752 = vpop.f32.mrf.mxu0
    %v753 = vadd.f32 %v614, %v752
    %v754 = vand.u32 %v45, 4294901760
    %755 = vmatmul.f32.gmra.mxu0 %v754
    %v756 = vpop.f32.mrf.mxu0
    %v757 = vadd.f32 %v620, %v756
    %v758 = vand.u32 %v46, 4294901760
    %759 = vmatmul.f32.gmra.mxu0 %v758
    %v760 = vpop.f32.mrf.mxu0
    %v761 = vadd.f32 %v626, %v760
    %v762 = vand.u32 %v47, 4294901760
    %763 = vmatmul.f32.gmra.mxu0 %v762
    %v764 = vpop.f32.mrf.mxu0
    %v765 = vadd.f32 %v632, %v764
    %v766 = vand.u32 %v48, 4294901760
    %767 = vmatmul.f32.gmra.mxu0 %v766
    %v768 = vpop.f32.mrf.mxu0
    %v769 = vadd.f32 %v638, %v768
    %v770 = vand.u32 %v49, 4294901760
    %771 = vmatmul.f32.gmra.mxu0 %v770
    %v772 = vpop.f32.mrf.mxu0
    %v773 = vadd.f32 %v644, %v772
    %774 = vdwg.mxu0
    %v775 = vand.u32 %v65, 4294901760
    %776 = vmatpush.msra.mxu0 %v775
    %v777 = vand.u32 %v64, 4294901760
    %778 = vmatpush.msra.mxu0 %v777
    %v779 = vand.u32 %v63, 4294901760
    %780 = vmatpush.msra.mxu0 %v779
    %v781 = vand.u32 %v62, 4294901760
    %782 = vmatpush.msra.mxu0 %v781
    %v783 = vand.u32 %v61, 4294901760
    %784 = vmatpush.msra.mxu0 %v783
    %v785 = vand.u32 %v60, 4294901760
    %786 = vmatpush.msra.mxu0 %v785
    %v787 = vand.u32 %v59, 4294901760
    %788 = vmatpush.msra.mxu0 %v787
    %v789 = vand.u32 %v58, 4294901760
    %790 = vmatpush.msra.mxu0 %v789
    %v791 = vand.u32 %v57, 4294901760
    %792 = vmatpush.msra.mxu0 %v791
    %v793 = vand.u32 %v56, 4294901760
    %794 = vmatpush.msra.mxu0 %v793
    %v795 = vand.u32 %v55, 4294901760
    %796 = vmatpush.msra.mxu0 %v795
    %v797 = vand.u32 %v54, 4294901760
    %798 = vmatpush.msra.mxu0 %v797
    %v799 = vand.u32 %v53, 4294901760
    %800 = vmatpush.msra.mxu0 %v799
    %v801 = vand.u32 %v52, 4294901760
    %802 = vmatpush.msra.mxu0 %v801
    %v803 = vand.u32 %v51, 4294901760
    %804 = vmatpush.msra.mxu0 %v803
    %v805 = vand.u32 %v50, 4294901760
    %806 = vmatpush.msra.mxu0 %v805
    %v807 = vand.u32 %v34, 4294901760
    %808 = vmatmul.f32.gmra.mxu0 %v807
    %v809 = vpop.f32.mrf.mxu0
    %v810 = vadd.f32 %v713, %v809
    %v811 = vand.u32 %v35, 4294901760
    %812 = vmatmul.f32.gmra.mxu0 %v811
    %v813 = vpop.f32.mrf.mxu0
    %v814 = vadd.f32 %v717, %v813
    %v815 = vand.u32 %v36, 4294901760
    %816 = vmatmul.f32.gmra.mxu0 %v815
    %v817 = vpop.f32.mrf.mxu0
    %v818 = vadd.f32 %v721, %v817
    %v819 = vand.u32 %v37, 4294901760
    %820 = vmatmul.f32.gmra.mxu0 %v819
    %v821 = vpop.f32.mrf.mxu0
    %v822 = vadd.f32 %v725, %v821
    %v823 = vand.u32 %v38, 4294901760
    %824 = vmatmul.f32.gmra.mxu0 %v823
    %v825 = vpop.f32.mrf.mxu0
    %v826 = vadd.f32 %v729, %v825
    %v827 = vand.u32 %v39, 4294901760
    %828 = vmatmul.f32.gmra.mxu0 %v827
    %v829 = vpop.f32.mrf.mxu0
    %v830 = vadd.f32 %v733, %v829
    %v831 = vand.u32 %v40, 4294901760
    %832 = vmatmul.f32.gmra.mxu0 %v831
    %v833 = vpop.f32.mrf.mxu0
    %v834 = vadd.f32 %v737, %v833
    %v835 = vand.u32 %v41, 4294901760
    %836 = vmatmul.f32.gmra.mxu0 %v835
    %v837 = vpop.f32.mrf.mxu0
    %v838 = vadd.f32 %v741, %v837
    %v839 = vand.u32 %v42, 4294901760
    %840 = vmatmul.f32.gmra.mxu0 %v839
    %v841 = vpop.f32.mrf.mxu0
    %v842 = vadd.f32 %v745, %v841
    %v843 = vand.u32 %v43, 4294901760
    %844 = vmatmul.f32.gmra.mxu0 %v843
    %v845 = vpop.f32.mrf.mxu0
    %v846 = vadd.f32 %v749, %v845
    %v847 = vand.u32 %v44, 4294901760
    %848 = vmatmul.f32.gmra.mxu0 %v847
    %v849 = vpop.f32.mrf.mxu0
    %v850 = vadd.f32 %v753, %v849
    %v851 = vand.u32 %v45, 4294901760
    %852 = vmatmul.f32.gmra.mxu0 %v851
    %v853 = vpop.f32.mrf.mxu0
    %v854 = vadd.f32 %v757, %v853
    %v855 = vand.u32 %v46, 4294901760
    %856 = vmatmul.f32.gmra.mxu0 %v855
    %v857 = vpop.f32.mrf.mxu0
    %v858 = vadd.f32 %v761, %v857
    %v859 = vand.u32 %v47, 4294901760
    %860 = vmatmul.f32.gmra.mxu0 %v859
    %v861 = vpop.f32.mrf.mxu0
    %v862 = vadd.f32 %v765, %v861
    %v863 = vand.u32 %v48, 4294901760
    %864 = vmatmul.f32.gmra.mxu0 %v863
    %v865 = vpop.f32.mrf.mxu0
    %v866 = vadd.f32 %v769, %v865
    %v867 = vand.u32 %v49, 4294901760
    %868 = vmatmul.f32.gmra.mxu0 %v867
    %v869 = vpop.f32.mrf.mxu0
    %v870 = vadd.f32 %v773, %v869
    %871 = vdwg.mxu0
    %v872 = vld [vmem:[%s2] sm:$0xff]
    %v873 = vld [vmem:[%s2 + $0x8] sm:$0xff]
    %v874 = vld [vmem:[%s2 + $0x10] sm:$0xff]
    %v875 = vld [vmem:[%s2 + $0x18] sm:$0xff]
    %v876 = vld [vmem:[%s2 + $0x20] sm:$0xff]
    %v877 = vld [vmem:[%s2 + $0x28] sm:$0xff]
    %v878 = vld [vmem:[%s2 + $0x30] sm:$0xff]
    %v879 = vld [vmem:[%s2 + $0x38] sm:$0xff]
    %v880 = vld [vmem:[%s2 + $0x40] sm:$0xff]
    %v881 = vld [vmem:[%s2 + $0x48] sm:$0xff]
    %v882 = vld [vmem:[%s2 + $0x50] sm:$0xff]
    %v883 = vld [vmem:[%s2 + $0x58] sm:$0xff]
    %v884 = vld [vmem:[%s2 + $0x60] sm:$0xff]
    %v885 = vld [vmem:[%s2 + $0x68] sm:$0xff]
    %v886 = vld [vmem:[%s2 + $0x70] sm:$0xff]
    %v887 = vld [vmem:[%s2 + $0x78] sm:$0xff]
    %v888 = vld [vmem:[%s3] sm:$0x1]
    %890 = vset.pattern.permute.xlu0 0
    %891 = vperm.xlu0 %890, %v872
    %v892 = vpop.permute.xlu0 %891
    %895 = vset.pattern.permute.xlu0 0
    %896 = vperm.xlu0 %895, %v873
    %v897 = vpop.permute.xlu0 %896
    %900 = vset.pattern.permute.xlu0 0
    %901 = vperm.xlu0 %900, %v874
    %v902 = vpop.permute.xlu0 %901
    %905 = vset.pattern.permute.xlu0 0
    %906 = vperm.xlu0 %905, %v875
    %v907 = vpop.permute.xlu0 %906
    %910 = vset.pattern.permute.xlu0 0
    %911 = vperm.xlu0 %910, %v876
    %v912 = vpop.permute.xlu0 %911
    %915 = vset.pattern.permute.xlu0 0
    %916 = vperm.xlu0 %915, %v877
    %v917 = vpop.permute.xlu0 %916
    %920 = vset.pattern.permute.xlu0 0
    %921 = vperm.xlu0 %920, %v878
    %v922 = vpop.permute.xlu0 %921
    %925 = vset.pattern.permute.xlu0 0
    %926 = vperm.xlu0 %925, %v879
    %v927 = vpop.permute.xlu0 %926
    %930 = vset.pattern.permute.xlu0 0
    %931 = vperm.xlu0 %930, %v880
    %v932 = vpop.permute.xlu0 %931
    %935 = vset.pattern.permute.xlu0 0
    %936 = vperm.xlu0 %935, %v881
    %v937 = vpop.permute.xlu0 %936
    %940 = vset.pattern.permute.xlu0 0
    %941 = vperm.xlu0 %940, %v882
    %v942 = vpop.permute.xlu0 %941
    %945 = vset.pattern.permute.xlu0 0
    %946 = vperm.xlu0 %945, %v883
    %v947 = vpop.permute.xlu0 %946
    %950 = vset.pattern.permute.xlu0 0
    %951 = vperm.xlu0 %950, %v884
    %v952 = vpop.permute.xlu0 %951
    %955 = vset.pattern.permute.xlu0 0
    %956 = vperm.xlu0 %955, %v885
    %v957 = vpop.permute.xlu0 %956
    %960 = vset.pattern.permute.xlu0 0
    %961 = vperm.xlu0 %960, %v886
    %v962 = vpop.permute.xlu0 %961
    %965 = vset.pattern.permute.xlu0 0
    %966 = vperm.xlu0 %965, %v887
    %v967 = vpop.permute.xlu0 %966
    %v970 = vperm.slane %v888, 0
    %v972 = vadd.f32 %v892, %v970
    %v973 = vadd.f32 %v897, %v970
    %v974 = vadd.f32 %v902, %v970
    %v975 = vadd.f32 %v907, %v970
    %v976 = vadd.f32 %v912, %v970
    %v977 = vadd.f32 %v917, %v970
    %v978 = vadd.f32 %v922, %v970
    %v979 = vadd.f32 %v927, %v970
    %v980 = vadd.f32 %v932, %v970
    %v981 = vadd.f32 %v937, %v970
    %v982 = vadd.f32 %v942, %v970
    %v983 = vadd.f32 %v947, %v970
    %v984 = vadd.f32 %v952, %v970
    %v985 = vadd.f32 %v957, %v970
    %v986 = vadd.f32 %v962, %v970
    %v987 = vadd.f32 %v967, %v970
    %v988 = vmul.f32 %v810, 2.0
    %v989 = vmul.f32 %v814, 2.0
    %v990 = vmul.f32 %v818, 2.0
    %v991 = vmul.f32 %v822, 2.0
    %v992 = vmul.f32 %v826, 2.0
    %v993 = vmul.f32 %v830, 2.0
    %v994 = vmul.f32 %v834, 2.0
    %v995 = vmul.f32 %v838, 2.0
    %v996 = vmul.f32 %v842, 2.0
    %v997 = vmul.f32 %v846, 2.0
    %v998 = vmul.f32 %v850, 2.0
    %v999 = vmul.f32 %v854, 2.0
    %v1000 = vmul.f32 %v858, 2.0
    %v1001 = vmul.f32 %v862, 2.0
    %v1002 = vmul.f32 %v866, 2.0
    %v1003 = vmul.f32 %v870, 2.0
    %v1004 = vsub.f32 %v972, %v988
    %v1005 = vsub.f32 %v973, %v989
    %v1006 = vsub.f32 %v974, %v990
    %v1007 = vsub.f32 %v975, %v991
    %v1008 = vsub.f32 %v976, %v992
    %v1009 = vsub.f32 %v977, %v993
    %v1010 = vsub.f32 %v978, %v994
    %v1011 = vsub.f32 %v979, %v995
    %v1012 = vsub.f32 %v980, %v996
    %v1013 = vsub.f32 %v981, %v997
    %v1014 = vsub.f32 %v982, %v998
    %v1015 = vsub.f32 %v983, %v999
    %v1016 = vsub.f32 %v984, %v1000
    %v1017 = vsub.f32 %v985, %v1001
    %v1018 = vsub.f32 %v986, %v1002
    %v1019 = vsub.f32 %v987, %v1003
    %1020 = vst [vmem:[#allocation5] sm:$0xff] %v1004
    %1021 = vst [vmem:[#allocation5 + $0x8] sm:$0xff] %v1005
    %1022 = vst [vmem:[#allocation5 + $0x10] sm:$0xff] %v1006
    %1023 = vst [vmem:[#allocation5 + $0x18] sm:$0xff] %v1007
    %1024 = vst [vmem:[#allocation5 + $0x20] sm:$0xff] %v1008
    %1025 = vst [vmem:[#allocation5 + $0x28] sm:$0xff] %v1009
    %1026 = vst [vmem:[#allocation5 + $0x30] sm:$0xff] %v1010
    %1027 = vst [vmem:[#allocation5 + $0x38] sm:$0xff] %v1011
    %1028 = vst [vmem:[#allocation5 + $0x40] sm:$0xff] %v1012
    %1029 = vst [vmem:[#allocation5 + $0x48] sm:$0xff] %v1013
    %1030 = vst [vmem:[#allocation5 + $0x50] sm:$0xff] %v1014
    %1031 = vst [vmem:[#allocation5 + $0x58] sm:$0xff] %v1015
    %1032 = vst [vmem:[#allocation5 + $0x60] sm:$0xff] %v1016
    %1033 = vst [vmem:[#allocation5 + $0x68] sm:$0xff] %v1017
    %1034 = vst [vmem:[#allocation5 + $0x70] sm:$0xff] %v1018
    %1035 = vst [vmem:[#allocation5 + $0x78] sm:$0xff] %v1019
    // Predicated region
    $region22: #{tpu_custom_call.1} parent=1 // pred_check
      _
    $region23: #{tpu_custom_call.1} parent=1 // pred_check_branch
      %1037 = sbr.rel (0) target = $region25
    $region24: #{tpu_custom_call.1} parent=1 // pred_region
      %1039 = vsyncadd [#allocation4], 0
      %s1040 = sshll.u32 [#allocation5], 4
      %s1041 = int_to_ptr.vmem [resolvable:$true] %s1040
      %s1042 = sshll.u32 %s4, 4
      %s1043 = int_to_ptr.hbm [resolvable:$true] %s1042
      %1048 = dma.vmem_to_hbm [thread:$0]  %s1041, 2048, %s1043, [#allocation4], 128, 128, 8
    $region25: #{tpu_custom_call.1} parent=1 // pred_fallthru
      _
    // Predicated region
    $region26: #{tpu_custom_call.1} parent=1 // pred_check
      _
    $region27: #{tpu_custom_call.1} parent=1 // pred_check_branch
      %1050 = sbr.rel (0) target = $region29
    $region28: #{tpu_custom_call.1} parent=1 // pred_region
      %1052 = dma.done [#allocation4], 2048
    $region29: #{tpu_custom_call.1} parent=1 // pred_fallthru
      _
    %1053 = vsyncpa [#allocation3], 1
    %1054 = vsyncpa [#allocation4], 1

</llo_original>
